<compile_context>
chip_gen: v7x
topology: tpu7x:2x2x1
jax: 0.10.0
libtpu: 0.0.40
codegen_flags: <defaults>
</compile_context>

<pallas_src>
import math

import numpy as np

import jax
import jax.numpy as jnp
from jax.experimental import pallas as pl
from jax.experimental.pallas import tpu as pltpu

_PI = math.pi
_TWO_PI = 2.0 * math.pi
_INV_TWO_PI = 1.0 / _TWO_PI

_SUBLANE = 8
_TARGET_BLOCK_BYTES = 2 << 20   # ~2 MiB per operand block: past the HBM-roofline knee,
                                # double-buffered total stays under v5e's 16 MiB scoped VMEM
_MIN_PALLAS_ELEMS = 1 << 20     # below this, fused XLA beats fixed pallas_call overhead


def _make_wrap_delta_kernel(K, apply_affine, strict_range):
    """Fused elementwise body: (tanh/clamp) -> (*std+mean) -> +state (K-way lane
    broadcast in-kernel) -> angle wrap. Purely HBM-bandwidth bound."""

    def kernel(*refs):
        if apply_affine:
            raw_ref, state_ref, sv_ref, mv_ref, out_ref = refs
        else:
            raw_ref, state_ref, out_ref = refs

        raw = raw_ref[...].astype(jnp.float32)                       # (bb, K*22)
        if strict_range:
            raw = jnp.clip(jnp.tanh(raw), -0.95, 0.95)                # EUP + VPU slack
        if apply_affine:
            raw = raw * sv_ref[...].astype(jnp.float32) + mv_ref[...].astype(jnp.float32)

        state = state_ref[...].astype(jnp.float32)                    # (bb, 22)
        if K > 1:
            # In-kernel K-way broadcast along lanes; replaces the wrapper-side
            # broadcast_to(...).reshape that cost a full extra HBM write + read.
            state = jnp.concatenate([state] * K, axis=-1)             # (bb, K*22)

        a = raw + state
        # floor-based wrap == torch.remainder semantics: (a + pi) % 2pi - pi
        k = jnp.floor((a + jnp.float32(_PI)) * jnp.float32(_INV_TWO_PI))
        out_ref[...] = a - jnp.float32(_TWO_PI) * k

    return kernel


def _choose_block_b(B, D):
    bb = (_TARGET_BLOCK_BYTES // (4 * D)) // _SUBLANE * _SUBLANE
    bb = max(_SUBLANE, bb)
    if bb >= B:
        return B            # single block; block_dim == full array dim is always legal
    return bb               # multiple of 8; ragged last block handled by Pallas masking


def _wrap_delta_pallas(raw, state22, sv, mv, K, strict_range):
    B, D = raw.shape
    apply_affine = sv is not None
    block_b = _choose_block_b(B, D)
    grid = (pl.cdiv(B, block_b),)

    in_specs = [
        pl.BlockSpec((block_b, D), lambda i: (i, 0)),        # raw action block
        pl.BlockSpec((block_b, 22), lambda i: (i, 0)),       # robot_state[:, :22] block
    ]
    operands = [raw, state22]
    if apply_affine:
        in_specs += [
            pl.BlockSpec((1, D), lambda i: (0, 0)),          # scale * output_std (resident)
            pl.BlockSpec((1, D), lambda i: (0, 0)),          # output_mean        (resident)
        ]
        operands += [sv, mv]

    return pl.pallas_call(
        _make_wrap_delta_kernel(K, apply_affine, strict_range),
        out_shape=jax.ShapeDtypeStruct((B, D), jnp.float32),  # exact shape: no pad / un-pad copies
        grid=grid,
        in_specs=in_specs,
        out_specs=pl.BlockSpec((block_b, D), lambda i: (i, 0)),
        compiler_params=pltpu.CompilerParams(
            # batch blocks are independent -> shard across TCs on multi-core parts
            dimension_semantics=("parallel",),
        ),
    )(*operands)


class PolicyPallas:
    """JAX/Pallas equivalent of the PyTorch Policy module (default 'raw_delta' path)."""

    def __init__(self, output_type="raw_delta", normalize_output=True, **kwargs):
        assert output_type == "raw_delta", "only the default 'raw_delta' path is implemented"
        self.output_type = output_type
        self.normalize_output = normalize_output
        self.scale = kwargs.get("scale", 1)
        self.inv = kwargs.get("inv", 0)
        self.strict_range = kwargs.get("strict_range", 0)
        self.min_pallas_elems = kwargs.get("min_pallas_elems", _MIN_PALLAS_ELEMS)
        # Buffers exactly as in nn.Module.__init__ (host constants -> fold at trace time).
        self.output_mean = np.zeros((22,), dtype=np.float32)
        self.output_std = np.ones((22,), dtype=np.float32)
        # TODO(synk): arm_param (UR5_PARAMS) only feeds the NotImplementedError
        # 'ee_delta' branch; omitted.

    def __call__(self, robot_state_stacked, visual_observation, output_raw=False):
        return self.pred_action(robot_state_stacked, visual_observation, output_raw)

    def pred_action(self, robot_state, action, output_raw=False):
        if not output_raw:
            action = self.raw_action_to_action(robot_state, action)
        return action

    def raw_action_to_action(self, robot_state, raw_action):
        B, D = raw_action.shape
        assert D % 22 == 0
        K = D // 22

        scale_vec = self.output_std.astype(np.float32) * np.float32(self.scale)   # (22,)
        mean_vec = self.output_mean.astype(np.float32)                            # (22,)
        affine_is_identity = bool(np.all(scale_vec == 1.0) and np.all(mean_vec == 0.0))

        # Tiny (B, 22) slice; the K-way broadcast happens in-kernel (no full-size copy).
        state22 = robot_state[:, :22]

        if B * D < self.min_pallas_elems:
            # Small-problem fallback: fused XLA elementwise beats pallas_call overhead.
            raw = raw_action.astype(jnp.float32)
            if self.strict_range:
                raw = jnp.clip(jnp.tanh(raw), -0.95, 0.95)
            raw3 = raw.reshape(B, K, 22)
            if not affine_is_identity:
                raw3 = raw3 * jnp.asarray(scale_vec) + jnp.asarray(mean_vec)
            act = state22.astype(jnp.float32)[:, None, :] + raw3
            act = (act + _PI) % _TWO_PI - _PI
            return act.reshape(B, D)

        sv = mv = None
        if not affine_is_identity:
            sv = jnp.asarray(np.tile(scale_vec, K), dtype=jnp.float32).reshape(1, D)
            mv = jnp.asarray(np.tile(mean_vec, K), dtype=jnp.float32).reshape(1, D)

        return _wrap_delta_pallas(raw_action, state22, sv, mv, K, bool(self.strict_range))


def _reference_np(robot_state, raw_action, mean, std, scale=1.0, strict_range=0):
    rs = np.asarray(robot_state, dtype=np.float64)
    ra = np.asarray(raw_action, dtype=np.float64)
    B = ra.shape[0]
    raw = ra.reshape(B, -1, 22)
    if strict_range:
        raw = np.clip(np.tanh(raw), -0.95, 0.95)
    raw = raw * scale * np.asarray(std, np.float64) + np.asarray(mean, np.float64)
    act = rs[:, None, :22] + raw
    act = (act + np.pi) % (2.0 * np.pi) - np.pi
    return act.reshape(B, -1)


def _circular_max_err(a, b):
    d = (np.asarray(a, np.float64) - np.asarray(b, np.float64) + np.pi) % (2.0 * np.pi) - np.pi
    return float(np.max(np.abs(d)))


if __name__ == "__main__":
    key = jax.random.PRNGKey(0)
    k1, k2 = jax.random.split(key)

    B, state_dim, K = 8, 32, 2      # robot state has >=22 dims; raw action = K horizon * 22
    D = K * 22
    robot_state = jax.random.normal(k1, (B, state_dim), dtype=jnp.float32) * 2.0
    raw_action = jax.random.normal(k2, (B, D), dtype=jnp.float32)

    ref = _reference_np(robot_state, raw_action,
                        np.zeros(22, np.float32), np.ones(22, np.float32))

    # Force the Pallas path (the shipped test size would otherwise use the XLA fallback).
    policy_pallas = PolicyPallas(output_type="raw_delta", normalize_output=True,
                                 min_pallas_elems=0)
    out = jax.block_until_ready(policy_pallas(robot_state, raw_action, output_raw=False))
    assert out.shape == (B, D), out.shape
    # Angle-robust comparison: values within ~1 ulp of the -pi/+pi boundary may wrap by
    # 2*pi depending on mod formulation; compare on the circle.
    assert _circular_max_err(out, ref) < 1e-4, "pallas path mismatch vs reference"

    # Also exercise the small-size fused-XLA fallback (default threshold).
    policy_auto = PolicyPallas(output_type="raw_delta", normalize_output=True)
    out2 = jax.block_until_ready(policy_auto(robot_state, raw_action, output_raw=False))
    assert _circular_max_err(out2, ref) < 1e-4, "fallback path mismatch vs reference"

    # output_raw=True passthrough.
    out3 = policy_pallas(robot_state, raw_action, output_raw=True)
    assert np.array_equal(np.asarray(out3), np.asarray(raw_action))

    print("KERNEL_OK")
</pallas_src>

<mosaic_0001>
module attributes {stable_mosaic.version = 11 : i64} {
  func.func @kernel(%arg0: i32, %arg1: memref<8x44xf32, #tpu.memory_space<vmem>>, %arg2: memref<8x22xf32, #tpu.memory_space<vmem>>, %arg3: memref<8x44xf32, #tpu.memory_space<vmem>>) attributes {dimension_semantics = [#tpu.dimension_semantics<parallel>], iteration_bounds = array<i64: 1>, scalar_prefetch = 0 : i64, scratch_operands = 0 : i64, tpu.core_type = #tpu.core_type<tc>, window_params = [{transform_indices = @transform_0, window_bounds = array<i64: 8, 44>}, {transform_indices = @transform_1, window_bounds = array<i64: 8, 22>}, {transform_indices = @transform_2, window_bounds = array<i64: 8, 44>}]} {
    %c0 = arith.constant 0 : index
    %c0_0 = arith.constant 0 : index
    %0 = vector.load %arg1[%c0, %c0_0] : memref<8x44xf32, #tpu.memory_space<vmem>>, vector<8x44xf32>
    %c0_1 = arith.constant 0 : index
    %c0_2 = arith.constant 0 : index
    %1 = vector.load %arg2[%c0_1, %c0_2] : memref<8x22xf32, #tpu.memory_space<vmem>>, vector<8x22xf32>
    %2 = tpu.concatenate %1, %1 in 1 : vector<8x22xf32>, vector<8x22xf32> -> vector<8x44xf32>
    %3 = arith.addf %0, %2 : vector<8x44xf32>
    %cst = arith.constant 3.14159274 : f32
    %4 = vector.broadcast %cst : f32 to vector<8x44xf32>
    %5 = arith.addf %3, %4 : vector<8x44xf32>
    %cst_3 = arith.constant 0.159154937 : f32
    %6 = vector.broadcast %cst_3 : f32 to vector<8x44xf32>
    %7 = arith.mulf %5, %6 : vector<8x44xf32>
    %8 = math.floor %7 : vector<8x44xf32>
    %cst_4 = arith.constant 6.28318548 : f32
    %9 = vector.broadcast %cst_4 : f32 to vector<8x44xf32>
    %10 = arith.mulf %9, %8 : vector<8x44xf32>
    %11 = arith.subf %3, %10 : vector<8x44xf32>
    %c0_5 = arith.constant 0 : index
    %c0_6 = arith.constant 0 : index
    %12 = vector.load %arg3[%c0_5, %c0_6] : memref<8x44xf32, #tpu.memory_space<vmem>>, vector<8x44xf32>
    tpu.vector_store %arg3[%c0_5, %c0_6], %11 {strides = array<i32>} : memref<8x44xf32, #tpu.memory_space<vmem>>, vector<8x44xf32>,
    return
  }
  func.func @transform_0(%arg0: i32) -> (i32, i32) {
    %c0_i32 = arith.constant 0 : i32
    %c0_i32_0 = arith.constant 0 : i32
    return %arg0, %c0_i32 : i32, i32
  }
  func.func @transform_1(%arg0: i32) -> (i32, i32) {
    %c0_i32 = arith.constant 0 : i32
    %c0_i32_0 = arith.constant 0 : i32
    return %arg0, %c0_i32 : i32, i32
  }
  func.func @transform_2(%arg0: i32) -> (i32, i32) {
    %c0_i32 = arith.constant 0 : i32
    %c0_i32_0 = arith.constant 0 : i32
    return %arg0, %c0_i32 : i32, i32
  }
}

</mosaic_0001>

<llo_original>
// kernel: tpu_custom_call.1
$region0: #{tpu_custom_call.1}
  #allocation0 [shape = 'u32[]', space=smem, size = 0x4, offset = 0x4, fixed_abs, tag = 'smem constant byte address 0x4 - core index']
  #allocation1 [shape = 'u32[144,128]{1,0:T(1,128)}', space=vmem, size = 0x12000, scoped, tag = 'internal scratch']
  %s0 = inlined_call_operand.hbm [shape: f32[8,44], index: 0, kind: input, shape index: {}]
  %s1 = inlined_call_operand.hbm [shape: f32[8,22], index: 1, kind: input, shape index: {}]
  %s2 = inlined_call_operand.hbm [shape: f32[8,44], index: 2, kind: output, shape index: {}]
  %s3 = sld [smem:[#allocation0]]
  $region26: #{tpu_custom_call.1} parent=0
    _
  %s5 = ssub.s32 1, %s3
  %s6 = scalar_select 0, %s5, %s3
  $region1: #{tpu_custom_call.1} parent=0
    #allocation2 [shape = 'u8[4096]{0}', space=vmem, size = 0x1000, scoped, tag = 'input window, operand 0, single buffered']
    #allocation3 [shape = 's32[1]{0}', space=sflag, size = 0x4, scoped, tag = 'scoped memory for tpu_custom_call.1']
    #allocation4 [shape = 's32[1]{0}', space=sflag, size = 0x4, scoped, tag = 'scoped memory for tpu_custom_call.1']
    #allocation5 [shape = 'u8[4096]{0}', space=vmem, size = 0x1000, scoped, tag = 'input window, operand 1, single buffered']
    #allocation6 [shape = 's32[1]{0}', space=sflag, size = 0x4, scoped, tag = 'scoped memory for tpu_custom_call.1']
    #allocation7 [shape = 'u8[4096]{0}', space=vmem, size = 0x1000, scoped, tag = 'output window, operand 0, single buffered']
    %7 = vsyncpa [#allocation3], 0
    %8 = vsyncpa [#allocation6], 0
    %9 = vsyncpa [#allocation4], 0
    // Predicated region
    $region2: #{tpu_custom_call.1} parent=1 // pred_check
      _
    $region3: #{tpu_custom_call.1} parent=1 // pred_check_branch
      %11 = sbr.rel (0) target = $region5
    $region4: #{tpu_custom_call.1} parent=1 // pred_region
      %s13 = ssub.s32 128, 128
      %14 = vsyncadd [#allocation3], %s13
      %s16 = sshll.u32 [#allocation2], 4
      %s17 = int_to_ptr.vmem [resolvable:$true] %s16
      %19 = dma.hbm_to_vmem [thread:$0]  %s0, 128, %s17, [#allocation3]
    $region5: #{tpu_custom_call.1} parent=1 // pred_fallthru
      _
    // Predicated region
    $region6: #{tpu_custom_call.1} parent=1 // pred_check
      _
    $region7: #{tpu_custom_call.1} parent=1 // pred_check_branch
      %21 = sbr.rel (0) target = $region9
    $region8: #{tpu_custom_call.1} parent=1 // pred_region
      %s23 = ssub.s32 128, 128
      %24 = vsyncadd [#allocation6], %s23
      %s26 = sshll.u32 [#allocation5], 4
      %s27 = int_to_ptr.vmem [resolvable:$true] %s26
      %29 = dma.hbm_to_vmem [thread:$0]  %s1, 128, %s27, [#allocation6]
    $region9: #{tpu_custom_call.1} parent=1 // pred_fallthru
      _
    // Predicated region
    $region10: #{tpu_custom_call.1} parent=1 // pred_check
      _
    $region11: #{tpu_custom_call.1} parent=1 // pred_check_branch
      %31 = sbr.rel (0) target = $region13
    $region12: #{tpu_custom_call.1} parent=1 // pred_region
      %32 = dma.done [#allocation3], 128
    $region13: #{tpu_custom_call.1} parent=1 // pred_fallthru
      _
    // Predicated region
    $region14: #{tpu_custom_call.1} parent=1 // pred_check
      _
    $region15: #{tpu_custom_call.1} parent=1 // pred_check_branch
      %34 = sbr.rel (0) target = $region17
    $region16: #{tpu_custom_call.1} parent=1 // pred_region
      %35 = dma.done [#allocation6], 128
    $region17: #{tpu_custom_call.1} parent=1 // pred_fallthru
      _
    %v36 = vld [vmem:[#allocation2] sm:$0xff]
    %v37 = vld [vmem:[#allocation5] sm:$0xff]
    %39 = vrot.lane.b32.xlu0 %v37, 22
    %v40 = vpop.permute.xlu0 %39
    %vm42 = vcmask 179200
    %v43 = vsel %vm42, %v37, %v40
    %v44 = vadd.f32 %v36, %v43
    %v45 = vadd.f32 %v44, 3.1415927
    %v46 = vmul.f32 %v45, 0.15915494
    %v47 = vfloor.f32 %v46
    %v48 = vmul.f32 %v47, 6.2831855
    %v49 = vsub.f32 %v44, %v48
    %vm50 = vcmask 359424
    %51 = vst.msk [vmem:[#allocation7] sm:$0xff] %vm50, %v49
    // Predicated region
    $region18: #{tpu_custom_call.1} parent=1 // pred_check
      _
    $region19: #{tpu_custom_call.1} parent=1 // pred_check_branch
      %53 = sbr.rel (0) target = $region21
    $region20: #{tpu_custom_call.1} parent=1 // pred_region
      %s55 = ssub.s32 128, 128
      %56 = vsyncadd [#allocation4], %s55
      %s58 = sshll.u32 [#allocation7], 4
      %s59 = int_to_ptr.vmem [resolvable:$true] %s58
      %61 = dma.vmem_to_hbm [thread:$0]  %s59, 128, %s2, [#allocation4]
    $region21: #{tpu_custom_call.1} parent=1 // pred_fallthru
      _
    // Predicated region
    $region22: #{tpu_custom_call.1} parent=1 // pred_check
      _
    $region23: #{tpu_custom_call.1} parent=1 // pred_check_branch
      %63 = sbr.rel (0) target = $region25
    $region24: #{tpu_custom_call.1} parent=1 // pred_region
      %64 = dma.done [#allocation4], 128
    $region25: #{tpu_custom_call.1} parent=1 // pred_fallthru
      _
    %65 = vsyncpa [#allocation3], 1
    %66 = vsyncpa [#allocation6], 1
    %67 = vsyncpa [#allocation4], 1

</llo_original>
